<compile_context>
chip_gen: v6e
topology: v6e:2x2x1
jax: 0.10.0
libtpu: 0.0.40
codegen_flags: <defaults>
</compile_context>

<pallas_src>
import jax
import jax.numpy as jnp
from jax.experimental import pallas as pl
from jax.experimental.pallas import tpu as pltpu


def mlp_kernel(x_ref, w1_ref, b1_ref, w2t_ref, b2t_ref, w3t_ref, b3t_ref, out_ref):
    # ----- layer 1 (row-major): (TB, 29) @ (29, 128) -> (TB, 128), f32 acc ---
    x = x_ref[...].astype(jnp.bfloat16)
    h1 = jnp.dot(x, w1_ref[...], preferred_element_type=jnp.float32) + b1_ref[...]
    h1 = jnp.maximum(h1, 0.0)

    # ----- switch to batch-on-lanes: one clean f32 (TB,128)->(128,TB) xpose --
    h1t = h1.T.astype(jnp.bfloat16)                            # (128, TB)

    # ----- layer 2 (transposed): (256,128) @ (128,TB) -> (256,TB) ------------
    h2t = jnp.dot(w2t_ref[...], h1t,
                  preferred_element_type=jnp.float32) + b2t_ref[...]
    h2t = jnp.maximum(h2t, 0.0)

    # ----- layer 3 head (transposed): (4,256) @ (256,TB) -> (4,TB) -----------
    logits_t = jnp.dot(w3t_ref[...], h2t.astype(jnp.bfloat16),
                       preferred_element_type=jnp.float32) + b3t_ref[...]

    # ----- lane-dense softmax / log_softmax epilogue on (4, TB) --------------
    m = jnp.max(logits_t, axis=0, keepdims=True)               # (1, TB)
    shifted = logits_t - m
    logsm = shifted - jnp.log(jnp.sum(jnp.exp(shifted), axis=0, keepdims=True))
    sm = jnp.exp(logsm)

    # Packed, lane-dense (8, TB) store: rows 0..3 log_softmax, rows 4..7 softmax.
    out_ref[...] = jnp.concatenate([logsm, sm], axis=0)


def mlp_forward(x, w1, b1, w2, b2, w3, b3, *, tb=4096):
    """x: (B, 29) f32. Returns (log_softmax, softmax), each (B, 4) f32."""
    B, K = x.shape
    H1 = w1.shape[1]
    H2 = w2.shape[1]
    C = w3.shape[1]

    # Batch tile: multiple of 256 lanes (MXU-friendly N for the transposed
    # matmuls / lane-dense output), capped at `tb`; force >= 2 grid steps for
    # anything bigger than one tile so megacore ("parallel") engages on v7x.
    LANE = 256
    B_up = pl.cdiv(B, LANE) * LANE
    n_steps = pl.cdiv(B_up, tb)
    if B_up >= 2 * LANE:
        n_steps = max(n_steps, 2)
    TB = pl.cdiv(pl.cdiv(B_up, n_steps), LANE) * LANE
    B_pad = TB * n_steps

    if B_pad != B:
        x = jnp.pad(x, ((0, B_pad - B), (0, 0)))

    # Pre-cast / pre-transpose the tiny weights once in the wrapper (negligible
    # cost; halves their HBM read + VMEM hold).  Biases stay f32, added after
    # the f32-accumulated matmuls; layer-2/3 biases are column vectors for the
    # batch-on-lanes layout.
    w1b = w1.astype(jnp.bfloat16)                # (29, 128)
    w2t = w2.T.astype(jnp.bfloat16)              # (256, 128)
    w3t = w3.T.astype(jnp.bfloat16)              # (4, 256)
    b1r = b1.reshape(1, H1)                      # (1, 128)
    b2t = b2.reshape(H2, 1)                      # (256, 1)
    b3t = b3.reshape(C, 1)                       # (4, 1)

    # TODO(synk): if the upstream producer can emit bf16 x, accept it directly
    # and drop the in-kernel cast (halves the dominant HBM read).

    out = pl.pallas_call(
        mlp_kernel,
        out_shape=jax.ShapeDtypeStruct((2 * C, B_pad), jnp.float32),
        grid=(B_pad // TB,),
        in_specs=[
            pl.BlockSpec((TB, K), lambda i: (i, 0)),    # x: tiled over batch
            pl.BlockSpec((K, H1), lambda i: (0, 0)),    # w1   (VMEM-resident)
            pl.BlockSpec((1, H1), lambda i: (0, 0)),    # b1
            pl.BlockSpec((H2, H1), lambda i: (0, 0)),   # w2^T
            pl.BlockSpec((H2, 1), lambda i: (0, 0)),    # b2 (column)
            pl.BlockSpec((C, H2), lambda i: (0, 0)),    # w3^T
            pl.BlockSpec((C, 1), lambda i: (0, 0)),     # b3 (column)
        ],
        out_specs=pl.BlockSpec((2 * C, TB), lambda i: (0, i)),
        compiler_params=pltpu.CompilerParams(
            dimension_semantics=("parallel",),
            vmem_limit_bytes=48 * 1024 * 1024,
        ),
    )(x, w1b, b1r, w2t, b2t, w3t, b3t)

    # Unpack: rows 0..C-1 = log_softmax, rows C..2C-1 = softmax; drop padding.
    log_probs = out[:C, :B].T
    probs = out[C:, :B].T
    return log_probs, probs


def init_params(key):
    # Deterministic synthetic parameters (shapes from the nn.Linear layers,
    # stored as (in, out) weights and flat biases).
    k1, k2, k3, k4, k5, k6 = jax.random.split(key, 6)
    w1 = jax.random.normal(k1, (29, 128), jnp.float32) * 0.1
    b1 = jax.random.normal(k2, (128,), jnp.float32) * 0.01
    w2 = jax.random.normal(k3, (128, 256), jnp.float32) * 0.1
    b2 = jax.random.normal(k4, (256,), jnp.float32) * 0.01
    w3 = jax.random.normal(k5, (256, 4), jnp.float32) * 0.1
    b3 = jax.random.normal(k6, (4,), jnp.float32) * 0.01
    return w1, b1, w2, b2, w3, b3


def _reference(x, params):
    w1, b1, w2, b2, w3, b3 = params
    h1 = jnp.maximum(x @ w1 + b1, 0.0)
    h2 = jnp.maximum(h1 @ w2 + b2, 0.0)
    logits = h2 @ w3 + b3
    return jax.nn.log_softmax(logits, axis=-1), jax.nn.softmax(logits, axis=-1)


if __name__ == "__main__":
    key = jax.random.PRNGKey(0)
    kx, kp = jax.random.split(key)
    params = init_params(kp)

    # Small test batches: aligned, ragged (padding path), and multi-grid-step.
    for B in (8, 5, 300):
        x = jax.random.normal(jax.random.fold_in(kx, B), (B, 29), jnp.float32)

        log_probs, probs = mlp_forward(x, *params)
        jax.block_until_ready((log_probs, probs))

        ref_log, ref_sm = _reference(x, params)

        # bf16 matmul operands -> loosened tolerance vs. the f32 reference.
        assert log_probs.shape == (B, 4) and probs.shape == (B, 4)
        assert jnp.allclose(log_probs, ref_log, atol=2e-2), "log_softmax mismatch"
        assert jnp.allclose(probs, ref_sm, atol=2e-2), "softmax mismatch"
        assert jnp.allclose(jnp.sum(probs, axis=-1), 1.0, atol=1e-4)

    print("KERNEL_OK")
</pallas_src>

<mosaic_0001>
module attributes {stable_mosaic.version = 11 : i64} {
  func.func @mlp_kernel(%arg0: i32, %arg1: memref<256x29xf32, #tpu.memory_space<vmem>>, %arg2: memref<29x128xbf16, #tpu.memory_space<vmem>>, %arg3: memref<1x128xf32, #tpu.memory_space<vmem>>, %arg4: memref<256x128xbf16, #tpu.memory_space<vmem>>, %arg5: memref<256x1xf32, #tpu.memory_space<vmem>>, %arg6: memref<4x256xbf16, #tpu.memory_space<vmem>>, %arg7: memref<4x1xf32, #tpu.memory_space<vmem>>, %arg8: memref<8x256xf32, #tpu.memory_space<vmem>>) attributes {dimension_semantics = [#tpu.dimension_semantics<parallel>], iteration_bounds = array<i64: 1>, scalar_prefetch = 0 : i64, scratch_operands = 0 : i64, tpu.core_type = #tpu.core_type<tc>, window_params = [{transform_indices = @transform_0, window_bounds = array<i64: 256, 29>}, {pipeline_mode = #tpu.pipeline_mode<synchronous>, transform_indices = @transform_1, window_bounds = array<i64: 29, 128>}, {pipeline_mode = #tpu.pipeline_mode<synchronous>, transform_indices = @transform_2, window_bounds = array<i64: 1, 128>}, {pipeline_mode = #tpu.pipeline_mode<synchronous>, transform_indices = @transform_3, window_bounds = array<i64: 256, 128>}, {pipeline_mode = #tpu.pipeline_mode<synchronous>, transform_indices = @transform_4, window_bounds = array<i64: 256, 1>}, {pipeline_mode = #tpu.pipeline_mode<synchronous>, transform_indices = @transform_5, window_bounds = array<i64: 4, 256>}, {pipeline_mode = #tpu.pipeline_mode<synchronous>, transform_indices = @transform_6, window_bounds = array<i64: 4, 1>}, {transform_indices = @transform_7, window_bounds = array<i64: 8, 256>}]} {
    %c0 = arith.constant 0 : index
    %c0_0 = arith.constant 0 : index
    %0 = vector.load %arg1[%c0, %c0_0] : memref<256x29xf32, #tpu.memory_space<vmem>>, vector<256x29xf32>
    %1 = arith.truncf %0 : vector<256x29xf32> to vector<256x29xbf16>
    %c0_1 = arith.constant 0 : index
    %c0_2 = arith.constant 0 : index
    %2 = vector.load %arg2[%c0_1, %c0_2] : memref<29x128xbf16, #tpu.memory_space<vmem>>, vector<29x128xbf16>
    %cst = arith.constant dense<0.000000e+00> : vector<256x128xf32>
    %3 = tpu.matmul %1, %2, %cst {dimension_numbers = #tpu.dot_dimension_numbers<[1], [0], [0], [1], [0, 0, 1, 1], [], []>} : vector<256x29xbf16>, vector<29x128xbf16>, vector<256x128xf32> -> vector<256x128xf32>
    %c0_3 = arith.constant 0 : index
    %c0_4 = arith.constant 0 : index
    %4 = vector.load %arg3[%c0_3, %c0_4] : memref<1x128xf32, #tpu.memory_space<vmem>>, vector<1x128xf32>
    %5 = vector.broadcast %4 : vector<1x128xf32> to vector<256x128xf32>
    %6 = arith.addf %3, %5 : vector<256x128xf32>
    %cst_5 = arith.constant 0.000000e+00 : f32
    %7 = vector.broadcast %cst_5 : f32 to vector<256x128xf32>
    %8 = arith.maximumf %6, %7 : vector<256x128xf32>
    %9 = tpu.transpose %8, [1, 0] : vector<256x128xf32> -> vector<128x256xf32>
    %10 = arith.truncf %9 : vector<128x256xf32> to vector<128x256xbf16>
    %c0_6 = arith.constant 0 : index
    %c0_7 = arith.constant 0 : index
    %11 = vector.load %arg4[%c0_6, %c0_7] : memref<256x128xbf16, #tpu.memory_space<vmem>>, vector<256x128xbf16>
    %cst_8 = arith.constant dense<0.000000e+00> : vector<256x256xf32>
    %12 = tpu.matmul %11, %10, %cst_8 {dimension_numbers = #tpu.dot_dimension_numbers<[1], [0], [0], [1], [0, 0, 1, 1], [], []>} : vector<256x128xbf16>, vector<128x256xbf16>, vector<256x256xf32> -> vector<256x256xf32>
    %c0_9 = arith.constant 0 : index
    %c0_10 = arith.constant 0 : index
    %13 = vector.load %arg5[%c0_9, %c0_10] : memref<256x1xf32, #tpu.memory_space<vmem>>, vector<256x1xf32>
    %14 = vector.broadcast %13 : vector<256x1xf32> to vector<256x256xf32>
    %15 = arith.addf %12, %14 : vector<256x256xf32>
    %cst_11 = arith.constant 0.000000e+00 : f32
    %16 = vector.broadcast %cst_11 : f32 to vector<256x256xf32>
    %17 = arith.maximumf %15, %16 : vector<256x256xf32>
    %c0_12 = arith.constant 0 : index
    %c0_13 = arith.constant 0 : index
    %18 = vector.load %arg6[%c0_12, %c0_13] : memref<4x256xbf16, #tpu.memory_space<vmem>>, vector<4x256xbf16>
    %19 = arith.truncf %17 : vector<256x256xf32> to vector<256x256xbf16>
    %cst_14 = arith.constant dense<0.000000e+00> : vector<4x256xf32>
    %20 = tpu.matmul %18, %19, %cst_14 {dimension_numbers = #tpu.dot_dimension_numbers<[1], [0], [0], [1], [0, 0, 1, 1], [], []>} : vector<4x256xbf16>, vector<256x256xbf16>, vector<4x256xf32> -> vector<4x256xf32>
    %c0_15 = arith.constant 0 : index
    %c0_16 = arith.constant 0 : index
    %21 = vector.load %arg7[%c0_15, %c0_16] : memref<4x1xf32, #tpu.memory_space<vmem>>, vector<4x1xf32>
    %22 = vector.broadcast %21 : vector<4x1xf32> to vector<4x256xf32>
    %23 = arith.addf %20, %22 : vector<4x256xf32>
    %cst_17 = arith.constant dense<0xFF800000> : vector<256xf32>
    %24 = vector.multi_reduction <maximumf>, %23, %cst_17 [0] : vector<4x256xf32> to vector<256xf32>
    %25 = vector.shape_cast %24 : vector<256xf32> to vector<1x256xf32>
    %26 = vector.broadcast %25 : vector<1x256xf32> to vector<4x256xf32>
    %27 = arith.subf %23, %26 : vector<4x256xf32>
    %28 = math.exp %27 : vector<4x256xf32>
    %cst_18 = arith.constant dense<0.000000e+00> : vector<256xf32>
    %29 = vector.multi_reduction <add>, %28, %cst_18 [0] : vector<4x256xf32> to vector<256xf32>
    %30 = vector.shape_cast %29 : vector<256xf32> to vector<1x256xf32>
    %31 = math.log %30 : vector<1x256xf32>
    %32 = vector.broadcast %31 : vector<1x256xf32> to vector<4x256xf32>
    %33 = arith.subf %27, %32 : vector<4x256xf32>
    %34 = math.exp %33 : vector<4x256xf32>
    %35 = tpu.concatenate %33, %34 in 0 : vector<4x256xf32>, vector<4x256xf32> -> vector<8x256xf32>
    %c0_19 = arith.constant 0 : index
    %c0_20 = arith.constant 0 : index
    %36 = vector.load %arg8[%c0_19, %c0_20] : memref<8x256xf32, #tpu.memory_space<vmem>>, vector<8x256xf32>
    tpu.vector_store %arg8[%c0_19, %c0_20], %35 {strides = array<i32>} : memref<8x256xf32, #tpu.memory_space<vmem>>, vector<8x256xf32>,
    return
  }
  func.func @transform_0(%arg0: i32) -> (i32, i32) {
    %c0_i32 = arith.constant 0 : i32
    %c0_i32_0 = arith.constant 0 : i32
    return %arg0, %c0_i32 : i32, i32
  }
  func.func @transform_1(%arg0: i32) -> (i32, i32) {
    %c0_i32 = arith.constant 0 : i32
    %c0_i32_0 = arith.constant 0 : i32
    %c0_i32_1 = arith.constant 0 : i32
    return %c0_i32, %c0_i32_0 : i32, i32
  }
  func.func @transform_2(%arg0: i32) -> (i32, i32) {
    %c0_i32 = arith.constant 0 : i32
    %c0_i32_0 = arith.constant 0 : i32
    %c0_i32_1 = arith.constant 0 : i32
    return %c0_i32, %c0_i32_0 : i32, i32
  }
  func.func @transform_3(%arg0: i32) -> (i32, i32) {
    %c0_i32 = arith.constant 0 : i32
    %c0_i32_0 = arith.constant 0 : i32
    %c0_i32_1 = arith.constant 0 : i32
    return %c0_i32, %c0_i32_0 : i32, i32
  }
  func.func @transform_4(%arg0: i32) -> (i32, i32) {
    %c0_i32 = arith.constant 0 : i32
    %c0_i32_0 = arith.constant 0 : i32
    %c0_i32_1 = arith.constant 0 : i32
    return %c0_i32, %c0_i32_0 : i32, i32
  }
  func.func @transform_5(%arg0: i32) -> (i32, i32) {
    %c0_i32 = arith.constant 0 : i32
    %c0_i32_0 = arith.constant 0 : i32
    %c0_i32_1 = arith.constant 0 : i32
    return %c0_i32, %c0_i32_0 : i32, i32
  }
  func.func @transform_6(%arg0: i32) -> (i32, i32) {
    %c0_i32 = arith.constant 0 : i32
    %c0_i32_0 = arith.constant 0 : i32
    %c0_i32_1 = arith.constant 0 : i32
    return %c0_i32, %c0_i32_0 : i32, i32
  }
  func.func @transform_7(%arg0: i32) -> (i32, i32) {
    %c0_i32 = arith.constant 0 : i32
    %c0_i32_0 = arith.constant 0 : i32
    return %c0_i32, %arg0 : i32, i32
  }
}

</mosaic_0001>

<llo_original>
// kernel: tpu_custom_call.1
$region0: #{tpu_custom_call.1}
  #allocation0 [shape = 'u32[]', space=smem, size = 0x4, offset = 0x4, fixed_abs, tag = 'smem constant byte address 0x4 - core index']
  #allocation1 [shape = 'u32[144,128]{1,0:T(1,128)}', space=vmem, size = 0x12000, scoped, tag = 'internal scratch']
  %s0 = inlined_call_operand.vmem [shape: f32[256,29], index: 0, kind: input, shape index: {}]
  %s1 = inlined_call_operand.vmem [shape: bf16[29,128], index: 1, kind: input, shape index: {}]
  %s2 = inlined_call_operand.vmem [shape: f32[1,128], index: 2, kind: input, shape index: {}]
  %s3 = inlined_call_operand.vmem [shape: bf16[256,128], index: 3, kind: input, shape index: {}]
  %s4 = inlined_call_operand.vmem [shape: f32[256,1], index: 4, kind: input, shape index: {}]
  %s5 = inlined_call_operand.vmem [shape: bf16[4,256], index: 5, kind: input, shape index: {}]
  %s6 = inlined_call_operand.vmem [shape: f32[4,1], index: 6, kind: input, shape index: {}]
  %s7 = inlined_call_operand.hbm [shape: f32[8,256], index: 7, kind: output, shape index: {}]
  %s8 = sld [smem:[#allocation0]]
  $region38: #{tpu_custom_call.1} parent=0
    _
  %s10 = ssub.s32 1, %s8
  %s11 = scalar_select 0, %s10, %s8
  $region1: #{tpu_custom_call.1} parent=0
    #allocation2 [shape = 'u8[8192]{0}', space=vmem, size = 0x2000, scoped, tag = 'output window, operand 0, single buffered']
    #allocation3 [shape = 's32[1]{0}', space=sflag, size = 0x4, scoped, tag = 'scoped memory for tpu_custom_call.1']
    %12 = vsyncpa [#allocation3], 0
    // Predicated region
    $region2: #{tpu_custom_call.1} parent=1 // pred_check
      _
    $region3: #{tpu_custom_call.1} parent=1 // pred_check_branch
      %14 = sbr.rel (0) target = $region5
    $region4: #{tpu_custom_call.1} parent=1 // pred_region
      _
    $region5: #{tpu_custom_call.1} parent=1 // pred_fallthru
      _
    // Predicated region
    $region6: #{tpu_custom_call.1} parent=1 // pred_check
      _
    $region7: #{tpu_custom_call.1} parent=1 // pred_check_branch
      %16 = sbr.rel (0) target = $region9
    $region8: #{tpu_custom_call.1} parent=1 // pred_region
      _
    $region9: #{tpu_custom_call.1} parent=1 // pred_fallthru
      _
    // Predicated region
    $region10: #{tpu_custom_call.1} parent=1 // pred_check
      _
    $region11: #{tpu_custom_call.1} parent=1 // pred_check_branch
      %18 = sbr.rel (0) target = $region13
    $region12: #{tpu_custom_call.1} parent=1 // pred_region
      _
    $region13: #{tpu_custom_call.1} parent=1 // pred_fallthru
      _
    // Predicated region
    $region14: #{tpu_custom_call.1} parent=1 // pred_check
      _
    $region15: #{tpu_custom_call.1} parent=1 // pred_check_branch
      %20 = sbr.rel (0) target = $region17
    $region16: #{tpu_custom_call.1} parent=1 // pred_region
      _
    $region17: #{tpu_custom_call.1} parent=1 // pred_fallthru
      _
    // Predicated region
    $region18: #{tpu_custom_call.1} parent=1 // pred_check
      _
    $region19: #{tpu_custom_call.1} parent=1 // pred_check_branch
      %22 = sbr.rel (0) target = $region21
    $region20: #{tpu_custom_call.1} parent=1 // pred_region
      _
    $region21: #{tpu_custom_call.1} parent=1 // pred_fallthru
      _
    // Predicated region
    $region22: #{tpu_custom_call.1} parent=1 // pred_check
      _
    $region23: #{tpu_custom_call.1} parent=1 // pred_check_branch
      %24 = sbr.rel (0) target = $region25
    $region24: #{tpu_custom_call.1} parent=1 // pred_region
      _
    $region25: #{tpu_custom_call.1} parent=1 // pred_fallthru
      _
    // Predicated region
    $region26: #{tpu_custom_call.1} parent=1 // pred_check
      _
    $region27: #{tpu_custom_call.1} parent=1 // pred_check_branch
      %26 = sbr.rel (0) target = $region29
    $region28: #{tpu_custom_call.1} parent=1 // pred_region
      _
    $region29: #{tpu_custom_call.1} parent=1 // pred_fallthru
      _
    %v28 = vld [vmem:[%s0] sm:$0xff]
    %v29 = vld [vmem:[%s0 + $0x8] sm:$0xff]
    %v30 = vld [vmem:[%s0 + $0x10] sm:$0xff]
    %v31 = vld [vmem:[%s0 + $0x18] sm:$0xff]
    %v32 = vld [vmem:[%s0 + $0x20] sm:$0xff]
    %v33 = vld [vmem:[%s0 + $0x28] sm:$0xff]
    %v34 = vld [vmem:[%s0 + $0x30] sm:$0xff]
    %v35 = vld [vmem:[%s0 + $0x38] sm:$0xff]
    %v36 = vld [vmem:[%s0 + $0x40] sm:$0xff]
    %v37 = vld [vmem:[%s0 + $0x48] sm:$0xff]
    %v38 = vld [vmem:[%s0 + $0x50] sm:$0xff]
    %v39 = vld [vmem:[%s0 + $0x58] sm:$0xff]
    %v40 = vld [vmem:[%s0 + $0x60] sm:$0xff]
    %v41 = vld [vmem:[%s0 + $0x68] sm:$0xff]
    %v42 = vld [vmem:[%s0 + $0x70] sm:$0xff]
    %v43 = vld [vmem:[%s0 + $0x78] sm:$0xff]
    %v44 = vld [vmem:[%s0 + $0x80] sm:$0xff]
    %v45 = vld [vmem:[%s0 + $0x88] sm:$0xff]
    %v46 = vld [vmem:[%s0 + $0x90] sm:$0xff]
    %v47 = vld [vmem:[%s0 + $0x98] sm:$0xff]
    %v48 = vld [vmem:[%s0 + $0xa0] sm:$0xff]
    %v49 = vld [vmem:[%s0 + $0xa8] sm:$0xff]
    %v50 = vld [vmem:[%s0 + $0xb0] sm:$0xff]
    %v51 = vld [vmem:[%s0 + $0xb8] sm:$0xff]
    %v52 = vld [vmem:[%s0 + $0xc0] sm:$0xff]
    %v53 = vld [vmem:[%s0 + $0xc8] sm:$0xff]
    %v54 = vld [vmem:[%s0 + $0xd0] sm:$0xff]
    %v55 = vld [vmem:[%s0 + $0xd8] sm:$0xff]
    %v56 = vld [vmem:[%s0 + $0xe0] sm:$0xff]
    %v57 = vld [vmem:[%s0 + $0xe8] sm:$0xff]
    %v58 = vld [vmem:[%s0 + $0xf0] sm:$0xff]
    %v59 = vld [vmem:[%s0 + $0xf8] sm:$0xff]
    %v60 = vpack.c.bf16 %v29, %v28
    %v61 = vpack.c.bf16 %v31, %v30
    %v62 = vpack.c.bf16 %v33, %v32
    %v63 = vpack.c.bf16 %v35, %v34
    %v64 = vpack.c.bf16 %v37, %v36
    %v65 = vpack.c.bf16 %v39, %v38
    %v66 = vpack.c.bf16 %v41, %v40
    %v67 = vpack.c.bf16 %v43, %v42
    %v68 = vpack.c.bf16 %v45, %v44
    %v69 = vpack.c.bf16 %v47, %v46
    %v70 = vpack.c.bf16 %v49, %v48
    %v71 = vpack.c.bf16 %v51, %v50
    %v72 = vpack.c.bf16 %v53, %v52
    %v73 = vpack.c.bf16 %v55, %v54
    %v74 = vpack.c.bf16 %v57, %v56
    %v75 = vpack.c.bf16 %v59, %v58
    %v76 = vld [vmem:[%s1] sm:$0xf]
    %v77 = vld [vmem:[%s1 + $0x4] sm:$0xf]
    %v78 = vld [vmem:[%s1 + $0x8] sm:$0xf]
    %v79 = vld [vmem:[%s1 + $0xc] sm:$0x7]
    %v80 = vld [vmem:[%s2] sm:$0x1]
    %v82 = vlaneseq
    %v83 = vshrl.u32 %v82, 7
    %v84 = vsub.s32 0, %v83
    %v85 = vrot.slane %v80, %v84
    %v91 = vunpack.c.l.b16 %v76
    %v92 = vunpack.c.l.b16 %v77
    %v93 = vunpack.c.l.b16 %v78
    %v94 = vunpack.c.l.b16 %v79
    %v95 = vpack.c.b16 %v92, %v91
    %v96 = vpack.c.b16 %v94, %v93
    %vm98 = vcmask 236544
    %v100 = vsel %vm98, %v60, 0
    %v103 = vsel %vm98, %v61, 0
    %v106 = vsel %vm98, %v62, 0
    %v109 = vsel %vm98, %v63, 0
    %v112 = vsel %vm98, %v64, 0
    %v115 = vsel %vm98, %v65, 0
    %v118 = vsel %vm98, %v66, 0
    %v121 = vsel %vm98, %v67, 0
    %v124 = vsel %vm98, %v68, 0
    %v127 = vsel %vm98, %v69, 0
    %v130 = vsel %vm98, %v70, 0
    %v133 = vsel %vm98, %v71, 0
    %v136 = vsel %vm98, %v72, 0
    %v139 = vsel %vm98, %v73, 0
    %v142 = vsel %vm98, %v74, 0
    %v145 = vsel %vm98, %v75, 0
    %vm147 = vcmask 1045504
    %vm148 = vcmask 1046528
    %v149 = vsel %vm147, 4294967295, 65535
    %v150 = vsel %vm148, %v149, 0
    %v152 = vand.u32 %v96, %v150
    %154 = vmatprep.subr.bf16.mxu0 0
    %155 = vmatpush1.bf16.msra.mxu0 0
    %156 = vmatprep.subr.bf16.mxu0 0
    %157 = vmatpush1.bf16.msra.mxu0 0
    %158 = vmatprep.subr.bf16.mxu0 0
    %159 = vmatpush1.bf16.msra.mxu0 0
    %160 = vmatprep.subr.bf16.mxu0 0
    %161 = vmatpush1.bf16.msra.mxu0 0
    %162 = vmatprep.subr.bf16.mxu0 0
    %163 = vmatpush1.bf16.msra.mxu0 0
    %164 = vmatprep.subr.bf16.mxu0 0
    %165 = vmatpush1.bf16.msra.mxu0 0
    %166 = vmatprep.subr.bf16.mxu0 0
    %167 = vmatpush1.bf16.msra.mxu0 %v152
    %168 = vmatprep.subr.bf16.mxu0 0
    %169 = vmatpush1.bf16.msra.mxu0 %v95
    %170 = vmatprep.subr.bf16.mxu0 0
    %171 = vmatpush2.bf16.msra.mxu0 0
    %172 = vmatprep.subr.bf16.mxu0 0
    %173 = vmatpush2.bf16.msra.mxu0 0
    %174 = vmatprep.subr.bf16.mxu0 0
    %175 = vmatpush2.bf16.msra.mxu0 0
    %176 = vmatprep.subr.bf16.mxu0 0
    %177 = vmatpush2.bf16.msra.mxu0 0
    %178 = vmatprep.subr.bf16.mxu0 0
    %179 = vmatpush2.bf16.msra.mxu0 0
    %180 = vmatprep.subr.bf16.mxu0 0
    %181 = vmatpush2.bf16.msra.mxu0 0
    %182 = vmatprep.subr.bf16.mxu0 0
    %183 = vmatpush2.bf16.msra.mxu0 0
    %184 = vmatprep.subr.bf16.mxu0 0
    %185 = vmatpush2.bf16.msra.mxu0 0
    %186 = vmatprep.mubr.bf16.mxu0 0
    %187 = vmatmul.mubr.bf16.gmra.mxu0 %v100
    %v188 = vpop.f32.mrf.mxu0
    %v189 = vadd.f32 %v85, %v188
    %v190 = vpop.f32.mrf.mxu0
    %v191 = vpop.f32.mrf.mxu0
    %v192 = vadd.f32 %v85, %v191
    %v193 = vpop.f32.mrf.mxu0
    %194 = vmatprep.mubr.bf16.mxu0 0
    %195 = vmatmul.mubr.bf16.gmra.mxu0 %v103
    %v196 = vpop.f32.mrf.mxu0
    %v197 = vadd.f32 %v85, %v196
    %v198 = vpop.f32.mrf.mxu0
    %v199 = vpop.f32.mrf.mxu0
    %v200 = vadd.f32 %v85, %v199
    %v201 = vpop.f32.mrf.mxu0
    %202 = vmatprep.mubr.bf16.mxu0 0
    %203 = vmatmul.mubr.bf16.gmra.mxu0 %v106
    %v204 = vpop.f32.mrf.mxu0
    %v205 = vadd.f32 %v85, %v204
    %v206 = vpop.f32.mrf.mxu0
    %v207 = vpop.f32.mrf.mxu0
    %v208 = vadd.f32 %v85, %v207
    %v209 = vpop.f32.mrf.mxu0
    %210 = vmatprep.mubr.bf16.mxu0 0
    %211 = vmatmul.mubr.bf16.gmra.mxu0 %v109
    %v212 = vpop.f32.mrf.mxu0
    %v213 = vadd.f32 %v85, %v212
    %v214 = vpop.f32.mrf.mxu0
    %v215 = vpop.f32.mrf.mxu0
    %v216 = vadd.f32 %v85, %v215
    %v217 = vpop.f32.mrf.mxu0
    %218 = vmatprep.mubr.bf16.mxu0 0
    %219 = vmatmul.mubr.bf16.gmra.mxu0 %v112
    %v220 = vpop.f32.mrf.mxu0
    %v221 = vadd.f32 %v85, %v220
    %v222 = vpop.f32.mrf.mxu0
    %v223 = vpop.f32.mrf.mxu0
    %v224 = vadd.f32 %v85, %v223
    %v225 = vpop.f32.mrf.mxu0
    %226 = vmatprep.mubr.bf16.mxu0 0
    %227 = vmatmul.mubr.bf16.gmra.mxu0 %v115
    %v228 = vpop.f32.mrf.mxu0
    %v229 = vadd.f32 %v85, %v228
    %v230 = vpop.f32.mrf.mxu0
    %v231 = vpop.f32.mrf.mxu0
    %v232 = vadd.f32 %v85, %v231
    %v233 = vpop.f32.mrf.mxu0
    %234 = vmatprep.mubr.bf16.mxu0 0
    %235 = vmatmul.mubr.bf16.gmra.mxu0 %v118
    %v236 = vpop.f32.mrf.mxu0
    %v237 = vadd.f32 %v85, %v236
    %v238 = vpop.f32.mrf.mxu0
    %v239 = vpop.f32.mrf.mxu0
    %v240 = vadd.f32 %v85, %v239
    %v241 = vpop.f32.mrf.mxu0
    %242 = vmatprep.mubr.bf16.mxu0 0
    %243 = vmatmul.mubr.bf16.gmra.mxu0 %v121
    %v244 = vpop.f32.mrf.mxu0
    %v245 = vadd.f32 %v85, %v244
    %v246 = vpop.f32.mrf.mxu0
    %v247 = vpop.f32.mrf.mxu0
    %v248 = vadd.f32 %v85, %v247
    %v249 = vpop.f32.mrf.mxu0
    %250 = vmatprep.mubr.bf16.mxu0 0
    %251 = vmatmul.mubr.bf16.gmra.mxu0 %v124
    %v252 = vpop.f32.mrf.mxu0
    %v253 = vadd.f32 %v85, %v252
    %v254 = vpop.f32.mrf.mxu0
    %v255 = vpop.f32.mrf.mxu0
    %v256 = vadd.f32 %v85, %v255
    %v257 = vpop.f32.mrf.mxu0
    %258 = vmatprep.mubr.bf16.mxu0 0
    %259 = vmatmul.mubr.bf16.gmra.mxu0 %v127
    %v260 = vpop.f32.mrf.mxu0
    %v261 = vadd.f32 %v85, %v260
    %v262 = vpop.f32.mrf.mxu0
    %v263 = vpop.f32.mrf.mxu0
    %v264 = vadd.f32 %v85, %v263
    %v265 = vpop.f32.mrf.mxu0
    %266 = vmatprep.mubr.bf16.mxu0 0
    %267 = vmatmul.mubr.bf16.gmra.mxu0 %v130
    %v268 = vpop.f32.mrf.mxu0
    %v269 = vadd.f32 %v85, %v268
    %v270 = vpop.f32.mrf.mxu0
    %v271 = vpop.f32.mrf.mxu0
    %v272 = vadd.f32 %v85, %v271
    %v273 = vpop.f32.mrf.mxu0
    %274 = vmatprep.mubr.bf16.mxu0 0
    %275 = vmatmul.mubr.bf16.gmra.mxu0 %v133
    %v276 = vpop.f32.mrf.mxu0
    %v277 = vadd.f32 %v85, %v276
    %v278 = vpop.f32.mrf.mxu0
    %v279 = vpop.f32.mrf.mxu0
    %v280 = vadd.f32 %v85, %v279
    %v281 = vpop.f32.mrf.mxu0
    %282 = vmatprep.mubr.bf16.mxu0 0
    %283 = vmatmul.mubr.bf16.gmra.mxu0 %v136
    %v284 = vpop.f32.mrf.mxu0
    %v285 = vadd.f32 %v85, %v284
    %v286 = vpop.f32.mrf.mxu0
    %v287 = vpop.f32.mrf.mxu0
    %v288 = vadd.f32 %v85, %v287
    %v289 = vpop.f32.mrf.mxu0
    %290 = vmatprep.mubr.bf16.mxu0 0
    %291 = vmatmul.mubr.bf16.gmra.mxu0 %v139
    %v292 = vpop.f32.mrf.mxu0
    %v293 = vadd.f32 %v85, %v292
    %v294 = vpop.f32.mrf.mxu0
    %v295 = vpop.f32.mrf.mxu0
    %v296 = vadd.f32 %v85, %v295
    %v297 = vpop.f32.mrf.mxu0
    %298 = vmatprep.mubr.bf16.mxu0 0
    %299 = vmatmul.mubr.bf16.gmra.mxu0 %v142
    %v300 = vpop.f32.mrf.mxu0
    %v301 = vadd.f32 %v85, %v300
    %v302 = vpop.f32.mrf.mxu0
    %v303 = vpop.f32.mrf.mxu0
    %v304 = vadd.f32 %v85, %v303
    %v305 = vpop.f32.mrf.mxu0
    %306 = vmatprep.mubr.bf16.mxu0 0
    %307 = vmatmul.mubr.bf16.gmra.mxu0 %v145
    %v308 = vpop.f32.mrf.mxu0
    %v309 = vadd.f32 %v85, %v308
    %v310 = vpop.f32.mrf.mxu0
    %v311 = vpop.f32.mrf.mxu0
    %v312 = vadd.f32 %v85, %v311
    %v313 = vpop.f32.mrf.mxu0
    %314 = vdwg.mxu0
    %v315 = vmax.f32 %v189, 0.0
    %v316 = vmax.f32 %v192, 0.0
    %v317 = vmax.f32 %v197, 0.0
    %v318 = vmax.f32 %v200, 0.0
    %v319 = vmax.f32 %v205, 0.0
    %v320 = vmax.f32 %v208, 0.0
    %v321 = vmax.f32 %v213, 0.0
    %v322 = vmax.f32 %v216, 0.0
    %v323 = vmax.f32 %v221, 0.0
    %v324 = vmax.f32 %v224, 0.0
    %v325 = vmax.f32 %v229, 0.0
    %v326 = vmax.f32 %v232, 0.0
    %v327 = vmax.f32 %v237, 0.0
    %v328 = vmax.f32 %v240, 0.0
    %v329 = vmax.f32 %v245, 0.0
    %v330 = vmax.f32 %v248, 0.0
    %v331 = vmax.f32 %v253, 0.0
    %v332 = vmax.f32 %v256, 0.0
    %v333 = vmax.f32 %v261, 0.0
    %v334 = vmax.f32 %v264, 0.0
    %v335 = vmax.f32 %v269, 0.0
    %v336 = vmax.f32 %v272, 0.0
    %v337 = vmax.f32 %v277, 0.0
    %v338 = vmax.f32 %v280, 0.0
    %v339 = vmax.f32 %v285, 0.0
    %v340 = vmax.f32 %v288, 0.0
    %v341 = vmax.f32 %v293, 0.0
    %v342 = vmax.f32 %v296, 0.0
    %v343 = vmax.f32 %v301, 0.0
    %v344 = vmax.f32 %v304, 0.0
    %v345 = vmax.f32 %v309, 0.0
    %v346 = vmax.f32 %v312, 0.0
    %347 = vxpose.xlu0.b32.start [1/16] %v315, 128
    %348 = vxpose.xlu0.b32.cont [2/16] %v316, 128
    %349 = vxpose.xlu0.b32.cont [3/16] %v317, 128
    %350 = vxpose.xlu0.b32.cont [4/16] %v318, 128
    %351 = vxpose.xlu0.b32.cont [5/16] %v319, 128
    %352 = vxpose.xlu0.b32.cont [6/16] %v320, 128
    %353 = vxpose.xlu0.b32.cont [7/16] %v321, 128
    %354 = vxpose.xlu0.b32.cont [8/16] %v322, 128
    %355 = vxpose.xlu0.b32.cont [9/16] %v323, 128
    %356 = vxpose.xlu0.b32.cont [10/16] %v324, 128
    %357 = vxpose.xlu0.b32.cont [11/16] %v325, 128
    %358 = vxpose.xlu0.b32.cont [12/16] %v326, 128
    %359 = vxpose.xlu0.b32.cont [13/16] %v327, 128
    %360 = vxpose.xlu0.b32.cont [14/16] %v328, 128
    %361 = vxpose.xlu0.b32.cont [15/16] %v329, 128
    %362 = vxpose.xlu0.b32.end [16/16] %v330, 128
    %v363 = vpop.trf.xlu0
    %v364 = vpop.trf.xlu0
    %v365 = vpop.trf.xlu0
    %v366 = vpop.trf.xlu0
    %v367 = vpop.trf.xlu0
    %v368 = vpop.trf.xlu0
    %v369 = vpop.trf.xlu0
    %v370 = vpop.trf.xlu0
    %v371 = vpop.trf.xlu0
    %v372 = vpop.trf.xlu0
    %v373 = vpop.trf.xlu0
    %v374 = vpop.trf.xlu0
    %v375 = vpop.trf.xlu0
    %v376 = vpop.trf.xlu0
    %v377 = vpop.trf.xlu0
    %v378 = vpop.trf.xlu0
    %379 = vxpose.xlu0.b32.start [1/16] %v331, 128
    %380 = vxpose.xlu0.b32.cont [2/16] %v332, 128
    %381 = vxpose.xlu0.b32.cont [3/16] %v333, 128
    %382 = vxpose.xlu0.b32.cont [4/16] %v334, 128
    %383 = vxpose.xlu0.b32.cont [5/16] %v335, 128
    %384 = vxpose.xlu0.b32.cont [6/16] %v336, 128
    %385 = vxpose.xlu0.b32.cont [7/16] %v337, 128
    %386 = vxpose.xlu0.b32.cont [8/16] %v338, 128
    %387 = vxpose.xlu0.b32.cont [9/16] %v339, 128
    %388 = vxpose.xlu0.b32.cont [10/16] %v340, 128
    %389 = vxpose.xlu0.b32.cont [11/16] %v341, 128
    %390 = vxpose.xlu0.b32.cont [12/16] %v342, 128
    %391 = vxpose.xlu0.b32.cont [13/16] %v343, 128
    %392 = vxpose.xlu0.b32.cont [14/16] %v344, 128
    %393 = vxpose.xlu0.b32.cont [15/16] %v345, 128
    %394 = vxpose.xlu0.b32.end [16/16] %v346, 128
    %v395 = vpop.trf.xlu0
    %v396 = vpop.trf.xlu0
    %v397 = vpop.trf.xlu0
    %v398 = vpop.trf.xlu0
    %v399 = vpop.trf.xlu0
    %v400 = vpop.trf.xlu0
    %v401 = vpop.trf.xlu0
    %v402 = vpop.trf.xlu0
    %v403 = vpop.trf.xlu0
    %v404 = vpop.trf.xlu0
    %v405 = vpop.trf.xlu0
    %v406 = vpop.trf.xlu0
    %v407 = vpop.trf.xlu0
    %v408 = vpop.trf.xlu0
    %v409 = vpop.trf.xlu0
    %v410 = vpop.trf.xlu0
    %v411 = vpack.c.bf16 %v364, %v363
    %v412 = vpack.c.bf16 %v396, %v395
    %v413 = vpack.c.bf16 %v366, %v365
    %v414 = vpack.c.bf16 %v398, %v397
    %v415 = vpack.c.bf16 %v368, %v367
    %v416 = vpack.c.bf16 %v400, %v399
    %v417 = vpack.c.bf16 %v370, %v369
    %v418 = vpack.c.bf16 %v402, %v401
    %v419 = vpack.c.bf16 %v372, %v371
    %v420 = vpack.c.bf16 %v404, %v403
    %v421 = vpack.c.bf16 %v374, %v373
    %v422 = vpack.c.bf16 %v406, %v405
    %v423 = vpack.c.bf16 %v376, %v375
    %v424 = vpack.c.bf16 %v408, %v407
    %v425 = vpack.c.bf16 %v378, %v377
    %v426 = vpack.c.bf16 %v410, %v409
    %v427 = vld [vmem:[%s3] sm:$0xf]
    %v428 = vld [vmem:[%s3 + $0x4] sm:$0xf]
    %v429 = vld [vmem:[%s3 + $0x8] sm:$0xf]
    %v430 = vld [vmem:[%s3 + $0xc] sm:$0xf]
    %v431 = vld [vmem:[%s3 + $0x10] sm:$0xf]
    %v432 = vld [vmem:[%s3 + $0x14] sm:$0xf]
    %v433 = vld [vmem:[%s3 + $0x18] sm:$0xf]
    %v434 = vld [vmem:[%s3 + $0x1c] sm:$0xf]
    %v435 = vld [vmem:[%s3 + $0x20] sm:$0xf]
    %v436 = vld [vmem:[%s3 + $0x24] sm:$0xf]
    %v437 = vld [vmem:[%s3 + $0x28] sm:$0xf]
    %v438 = vld [vmem:[%s3 + $0x2c] sm:$0xf]
    %v439 = vld [vmem:[%s3 + $0x30] sm:$0xf]
    %v440 = vld [vmem:[%s3 + $0x34] sm:$0xf]
    %v441 = vld [vmem:[%s3 + $0x38] sm:$0xf]
    %v442 = vld [vmem:[%s3 + $0x3c] sm:$0xf]
    %v443 = vld [vmem:[%s3 + $0x40] sm:$0xf]
    %v444 = vld [vmem:[%s3 + $0x44] sm:$0xf]
    %v445 = vld [vmem:[%s3 + $0x48] sm:$0xf]
    %v446 = vld [vmem:[%s3 + $0x4c] sm:$0xf]
    %v447 = vld [vmem:[%s3 + $0x50] sm:$0xf]
    %v448 = vld [vmem:[%s3 + $0x54] sm:$0xf]
    %v449 = vld [vmem:[%s3 + $0x58] sm:$0xf]
    %v450 = vld [vmem:[%s3 + $0x5c] sm:$0xf]
    %v451 = vld [vmem:[%s3 + $0x60] sm:$0xf]
    %v452 = vld [vmem:[%s3 + $0x64] sm:$0xf]
    %v453 = vld [vmem:[%s3 + $0x68] sm:$0xf]
    %v454 = vld [vmem:[%s3 + $0x6c] sm:$0xf]
    %v455 = vld [vmem:[%s3 + $0x70] sm:$0xf]
    %v456 = vld [vmem:[%s3 + $0x74] sm:$0xf]
    %v457 = vld [vmem:[%s3 + $0x78] sm:$0xf]
    %v458 = vld [vmem:[%s3 + $0x7c] sm:$0xf]
    %v459 = vld [vmem:[%s4] sm:$0xff]
    %v460 = vld [vmem:[%s4 + $0x8] sm:$0xff]
    %v461 = vld [vmem:[%s4 + $0x10] sm:$0xff]
    %v462 = vld [vmem:[%s4 + $0x18] sm:$0xff]
    %v463 = vld [vmem:[%s4 + $0x20] sm:$0xff]
    %v464 = vld [vmem:[%s4 + $0x28] sm:$0xff]
    %v465 = vld [vmem:[%s4 + $0x30] sm:$0xff]
    %v466 = vld [vmem:[%s4 + $0x38] sm:$0xff]
    %v467 = vld [vmem:[%s4 + $0x40] sm:$0xff]
    %v468 = vld [vmem:[%s4 + $0x48] sm:$0xff]
    %v469 = vld [vmem:[%s4 + $0x50] sm:$0xff]
    %v470 = vld [vmem:[%s4 + $0x58] sm:$0xff]
    %v471 = vld [vmem:[%s4 + $0x60] sm:$0xff]
    %v472 = vld [vmem:[%s4 + $0x68] sm:$0xff]
    %v473 = vld [vmem:[%s4 + $0x70] sm:$0xff]
    %v474 = vld [vmem:[%s4 + $0x78] sm:$0xff]
    %v475 = vld [vmem:[%s4 + $0x80] sm:$0xff]
    %v476 = vld [vmem:[%s4 + $0x88] sm:$0xff]
    %v477 = vld [vmem:[%s4 + $0x90] sm:$0xff]
    %v478 = vld [vmem:[%s4 + $0x98] sm:$0xff]
    %v479 = vld [vmem:[%s4 + $0xa0] sm:$0xff]
    %v480 = vld [vmem:[%s4 + $0xa8] sm:$0xff]
    %v481 = vld [vmem:[%s4 + $0xb0] sm:$0xff]
    %v482 = vld [vmem:[%s4 + $0xb8] sm:$0xff]
    %v483 = vld [vmem:[%s4 + $0xc0] sm:$0xff]
    %v484 = vld [vmem:[%s4 + $0xc8] sm:$0xff]
    %v485 = vld [vmem:[%s4 + $0xd0] sm:$0xff]
    %v486 = vld [vmem:[%s4 + $0xd8] sm:$0xff]
    %v487 = vld [vmem:[%s4 + $0xe0] sm:$0xff]
    %v488 = vld [vmem:[%s4 + $0xe8] sm:$0xff]
    %v489 = vld [vmem:[%s4 + $0xf0] sm:$0xff]
    %v490 = vld [vmem:[%s4 + $0xf8] sm:$0xff]
    %492 = vset.pattern.permute.xlu0 0
    %493 = vperm.xlu0 %492, %v459
    %v494 = vpop.permute.xlu0 %493
    %497 = vset.pattern.permute.xlu0 0
    %498 = vperm.xlu0 %497, %v460
    %v499 = vpop.permute.xlu0 %498
    %502 = vset.pattern.permute.xlu0 0
    %503 = vperm.xlu0 %502, %v461
    %v504 = vpop.permute.xlu0 %503
    %507 = vset.pattern.permute.xlu0 0
    %508 = vperm.xlu0 %507, %v462
    %v509 = vpop.permute.xlu0 %508
    %512 = vset.pattern.permute.xlu0 0
    %513 = vperm.xlu0 %512, %v463
    %v514 = vpop.permute.xlu0 %513
    %517 = vset.pattern.permute.xlu0 0
    %518 = vperm.xlu0 %517, %v464
    %v519 = vpop.permute.xlu0 %518
    %522 = vset.pattern.permute.xlu0 0
    %523 = vperm.xlu0 %522, %v465
    %v524 = vpop.permute.xlu0 %523
    %527 = vset.pattern.permute.xlu0 0
    %528 = vperm.xlu0 %527, %v466
    %v529 = vpop.permute.xlu0 %528
    %532 = vset.pattern.permute.xlu0 0
    %533 = vperm.xlu0 %532, %v467
    %v534 = vpop.permute.xlu0 %533
    %537 = vset.pattern.permute.xlu0 0
    %538 = vperm.xlu0 %537, %v468
    %v539 = vpop.permute.xlu0 %538
    %542 = vset.pattern.permute.xlu0 0
    %543 = vperm.xlu0 %542, %v469
    %v544 = vpop.permute.xlu0 %543
    %547 = vset.pattern.permute.xlu0 0
    %548 = vperm.xlu0 %547, %v470
    %v549 = vpop.permute.xlu0 %548
    %552 = vset.pattern.permute.xlu0 0
    %553 = vperm.xlu0 %552, %v471
    %v554 = vpop.permute.xlu0 %553
    %557 = vset.pattern.permute.xlu0 0
    %558 = vperm.xlu0 %557, %v472
    %v559 = vpop.permute.xlu0 %558
    %562 = vset.pattern.permute.xlu0 0
    %563 = vperm.xlu0 %562, %v473
    %v564 = vpop.permute.xlu0 %563
    %567 = vset.pattern.permute.xlu0 0
    %568 = vperm.xlu0 %567, %v474
    %v569 = vpop.permute.xlu0 %568
    %572 = vset.pattern.permute.xlu0 0
    %573 = vperm.xlu0 %572, %v475
    %v574 = vpop.permute.xlu0 %573
    %577 = vset.pattern.permute.xlu0 0
    %578 = vperm.xlu0 %577, %v476
    %v579 = vpop.permute.xlu0 %578
    %582 = vset.pattern.permute.xlu0 0
    %583 = vperm.xlu0 %582, %v477
    %v584 = vpop.permute.xlu0 %583
    %587 = vset.pattern.permute.xlu0 0
    %588 = vperm.xlu0 %587, %v478
    %v589 = vpop.permute.xlu0 %588
    %592 = vset.pattern.permute.xlu0 0
    %593 = vperm.xlu0 %592, %v479
    %v594 = vpop.permute.xlu0 %593
    %597 = vset.pattern.permute.xlu0 0
    %598 = vperm.xlu0 %597, %v480
    %v599 = vpop.permute.xlu0 %598
    %602 = vset.pattern.permute.xlu0 0
    %603 = vperm.xlu0 %602, %v481
    %v604 = vpop.permute.xlu0 %603
    %607 = vset.pattern.permute.xlu0 0
    %608 = vperm.xlu0 %607, %v482
    %v609 = vpop.permute.xlu0 %608
    %612 = vset.pattern.permute.xlu0 0
    %613 = vperm.xlu0 %612, %v483
    %v614 = vpop.permute.xlu0 %613
    %617 = vset.pattern.permute.xlu0 0
    %618 = vperm.xlu0 %617, %v484
    %v619 = vpop.permute.xlu0 %618
    %622 = vset.pattern.permute.xlu0 0
    %623 = vperm.xlu0 %622, %v485
    %v624 = vpop.permute.xlu0 %623
    %627 = vset.pattern.permute.xlu0 0
    %628 = vperm.xlu0 %627, %v486
    %v629 = vpop.permute.xlu0 %628
    %632 = vset.pattern.permute.xlu0 0
    %633 = vperm.xlu0 %632, %v487
    %v634 = vpop.permute.xlu0 %633
    %637 = vset.pattern.permute.xlu0 0
    %638 = vperm.xlu0 %637, %v488
    %v639 = vpop.permute.xlu0 %638
    %642 = vset.pattern.permute.xlu0 0
    %643 = vperm.xlu0 %642, %v489
    %v644 = vpop.permute.xlu0 %643
    %647 = vset.pattern.permute.xlu0 0
    %648 = vperm.xlu0 %647, %v490
    %v649 = vpop.permute.xlu0 %648
    %v683 = vunpack.c.l.b16 %v427
    %v684 = vunpack.c.l.b16 %v428
    %v685 = vunpack.c.l.b16 %v429
    %v686 = vunpack.c.l.b16 %v430
    %v687 = vunpack.c.l.b16 %v431
    %v688 = vunpack.c.l.b16 %v432
    %v689 = vunpack.c.l.b16 %v433
    %v690 = vunpack.c.l.b16 %v434
    %v691 = vunpack.c.l.b16 %v435
    %v692 = vunpack.c.l.b16 %v436
    %v693 = vunpack.c.l.b16 %v437
    %v694 = vunpack.c.l.b16 %v438
    %v695 = vunpack.c.l.b16 %v439
    %v696 = vunpack.c.l.b16 %v440
    %v697 = vunpack.c.l.b16 %v441
    %v698 = vunpack.c.l.b16 %v442
    %v699 = vunpack.c.l.b16 %v443
    %v700 = vunpack.c.l.b16 %v444
    %v701 = vunpack.c.l.b16 %v445
    %v702 = vunpack.c.l.b16 %v446
    %v703 = vunpack.c.l.b16 %v447
    %v704 = vunpack.c.l.b16 %v448
    %v705 = vunpack.c.l.b16 %v449
    %v706 = vunpack.c.l.b16 %v450
    %v707 = vunpack.c.l.b16 %v451
    %v708 = vunpack.c.l.b16 %v452
    %v709 = vunpack.c.l.b16 %v453
    %v710 = vunpack.c.l.b16 %v454
    %v711 = vunpack.c.l.b16 %v455
    %v712 = vunpack.c.l.b16 %v456
    %v713 = vunpack.c.l.b16 %v457
    %v714 = vunpack.c.l.b16 %v458
    %v715 = vpack.c.b16 %v684, %v683
    %v716 = vpack.c.b16 %v686, %v685
    %v717 = vpack.c.b16 %v688, %v687
    %v718 = vpack.c.b16 %v690, %v689
    %v719 = vpack.c.b16 %v692, %v691
    %v720 = vpack.c.b16 %v694, %v693
    %v721 = vpack.c.b16 %v696, %v695
    %v722 = vpack.c.b16 %v698, %v697
    %v723 = vpack.c.b16 %v700, %v699
    %v724 = vpack.c.b16 %v702, %v701
    %v725 = vpack.c.b16 %v704, %v703
    %v726 = vpack.c.b16 %v706, %v705
    %v727 = vpack.c.b16 %v708, %v707
    %v728 = vpack.c.b16 %v710, %v709
    %v729 = vpack.c.b16 %v712, %v711
    %v730 = vpack.c.b16 %v714, %v713
    %747 = vmatprep.subr.bf16.mxu0 %v426
    %748 = vmatpush1.bf16.msra.mxu0 %v425
    %749 = vmatprep.subr.bf16.mxu0 %v424
    %750 = vmatpush1.bf16.msra.mxu0 %v423
    %751 = vmatprep.subr.bf16.mxu0 %v422
    %752 = vmatpush1.bf16.msra.mxu0 %v421
    %753 = vmatprep.subr.bf16.mxu0 %v420
    %754 = vmatpush1.bf16.msra.mxu0 %v419
    %755 = vmatprep.subr.bf16.mxu0 %v418
    %756 = vmatpush1.bf16.msra.mxu0 %v417
    %757 = vmatprep.subr.bf16.mxu0 %v416
    %758 = vmatpush1.bf16.msra.mxu0 %v415
    %759 = vmatprep.subr.bf16.mxu0 %v414
    %760 = vmatpush1.bf16.msra.mxu0 %v413
    %761 = vmatprep.subr.bf16.mxu0 %v412
    %762 = vmatpush1.bf16.msra.mxu0 %v411
    %763 = vmatprep.subr.bf16.mxu0 0
    %764 = vmatpush2.bf16.msra.mxu0 0
    %765 = vmatprep.subr.bf16.mxu0 0
    %766 = vmatpush2.bf16.msra.mxu0 0
    %767 = vmatprep.subr.bf16.mxu0 0
    %768 = vmatpush2.bf16.msra.mxu0 0
    %769 = vmatprep.subr.bf16.mxu0 0
    %770 = vmatpush2.bf16.msra.mxu0 0
    %771 = vmatprep.subr.bf16.mxu0 0
    %772 = vmatpush2.bf16.msra.mxu0 0
    %773 = vmatprep.subr.bf16.mxu0 0
    %774 = vmatpush2.bf16.msra.mxu0 0
    %775 = vmatprep.subr.bf16.mxu0 0
    %776 = vmatpush2.bf16.msra.mxu0 0
    %777 = vmatprep.subr.bf16.mxu0 0
    %778 = vmatpush2.bf16.msra.mxu0 0
    %779 = vmatprep.mubr.bf16.mxu0 0
    %780 = vmatmul.mubr.bf16.gmra.mxu0 %v715
    %v781 = vpop.f32.mrf.mxu0
    %v782 = vadd.f32 %v494, %v781
    %v783 = vpop.f32.mrf.mxu0
    %v784 = vadd.f32 %v494, %v783
    %v785 = vpop.f32.mrf.mxu0
    %v786 = vadd.f32 %v499, %v785
    %v787 = vpop.f32.mrf.mxu0
    %v788 = vadd.f32 %v499, %v787
    %789 = vmatprep.mubr.bf16.mxu0 0
    %790 = vmatmul.mubr.bf16.gmra.mxu0 %v716
    %v791 = vpop.f32.mrf.mxu0
    %v792 = vadd.f32 %v504, %v791
    %v793 = vpop.f32.mrf.mxu0
    %v794 = vadd.f32 %v504, %v793
    %v795 = vpop.f32.mrf.mxu0
    %v796 = vadd.f32 %v509, %v795
    %v797 = vpop.f32.mrf.mxu0
    %v798 = vadd.f32 %v509, %v797
    %799 = vmatprep.mubr.bf16.mxu0 0
    %800 = vmatmul.mubr.bf16.gmra.mxu0 %v717
    %v801 = vpop.f32.mrf.mxu0
    %v802 = vadd.f32 %v514, %v801
    %v803 = vpop.f32.mrf.mxu0
    %v804 = vadd.f32 %v514, %v803
    %v805 = vpop.f32.mrf.mxu0
    %v806 = vadd.f32 %v519, %v805
    %v807 = vpop.f32.mrf.mxu0
    %v808 = vadd.f32 %v519, %v807
    %809 = vmatprep.mubr.bf16.mxu0 0
    %810 = vmatmul.mubr.bf16.gmra.mxu0 %v718
    %v811 = vpop.f32.mrf.mxu0
    %v812 = vadd.f32 %v524, %v811
    %v813 = vpop.f32.mrf.mxu0
    %v814 = vadd.f32 %v524, %v813
    %v815 = vpop.f32.mrf.mxu0
    %v816 = vadd.f32 %v529, %v815
    %v817 = vpop.f32.mrf.mxu0
    %v818 = vadd.f32 %v529, %v817
    %819 = vmatprep.mubr.bf16.mxu0 0
    %820 = vmatmul.mubr.bf16.gmra.mxu0 %v719
    %v821 = vpop.f32.mrf.mxu0
    %v822 = vadd.f32 %v534, %v821
    %v823 = vpop.f32.mrf.mxu0
    %v824 = vadd.f32 %v534, %v823
    %v825 = vpop.f32.mrf.mxu0
    %v826 = vadd.f32 %v539, %v825
    %v827 = vpop.f32.mrf.mxu0
    %v828 = vadd.f32 %v539, %v827
    %829 = vmatprep.mubr.bf16.mxu0 0
    %830 = vmatmul.mubr.bf16.gmra.mxu0 %v720
    %v831 = vpop.f32.mrf.mxu0
    %v832 = vadd.f32 %v544, %v831
    %v833 = vpop.f32.mrf.mxu0
    %v834 = vadd.f32 %v544, %v833
    %v835 = vpop.f32.mrf.mxu0
    %v836 = vadd.f32 %v549, %v835
    %v837 = vpop.f32.mrf.mxu0
    %v838 = vadd.f32 %v549, %v837
    %839 = vmatprep.mubr.bf16.mxu0 0
    %840 = vmatmul.mubr.bf16.gmra.mxu0 %v721
    %v841 = vpop.f32.mrf.mxu0
    %v842 = vadd.f32 %v554, %v841
    %v843 = vpop.f32.mrf.mxu0
    %v844 = vadd.f32 %v554, %v843
    %v845 = vpop.f32.mrf.mxu0
    %v846 = vadd.f32 %v559, %v845
    %v847 = vpop.f32.mrf.mxu0
    %v848 = vadd.f32 %v559, %v847
    %849 = vmatprep.mubr.bf16.mxu0 0
    %850 = vmatmul.mubr.bf16.gmra.mxu0 %v722
    %v851 = vpop.f32.mrf.mxu0
    %v852 = vadd.f32 %v564, %v851
    %v853 = vpop.f32.mrf.mxu0
    %v854 = vadd.f32 %v564, %v853
    %v855 = vpop.f32.mrf.mxu0
    %v856 = vadd.f32 %v569, %v855
    %v857 = vpop.f32.mrf.mxu0
    %v858 = vadd.f32 %v569, %v857
    %859 = vmatprep.mubr.bf16.mxu0 0
    %860 = vmatmul.mubr.bf16.gmra.mxu0 %v723
    %v861 = vpop.f32.mrf.mxu0
    %v862 = vadd.f32 %v574, %v861
    %v863 = vpop.f32.mrf.mxu0
    %v864 = vadd.f32 %v574, %v863
    %v865 = vpop.f32.mrf.mxu0
    %v866 = vadd.f32 %v579, %v865
    %v867 = vpop.f32.mrf.mxu0
    %v868 = vadd.f32 %v579, %v867
    %869 = vmatprep.mubr.bf16.mxu0 0
    %870 = vmatmul.mubr.bf16.gmra.mxu0 %v724
    %v871 = vpop.f32.mrf.mxu0
    %v872 = vadd.f32 %v584, %v871
    %v873 = vpop.f32.mrf.mxu0
    %v874 = vadd.f32 %v584, %v873
    %v875 = vpop.f32.mrf.mxu0
    %v876 = vadd.f32 %v589, %v875
    %v877 = vpop.f32.mrf.mxu0
    %v878 = vadd.f32 %v589, %v877
    %879 = vmatprep.mubr.bf16.mxu0 0
    %880 = vmatmul.mubr.bf16.gmra.mxu0 %v725
    %v881 = vpop.f32.mrf.mxu0
    %v882 = vadd.f32 %v594, %v881
    %v883 = vpop.f32.mrf.mxu0
    %v884 = vadd.f32 %v594, %v883
    %v885 = vpop.f32.mrf.mxu0
    %v886 = vadd.f32 %v599, %v885
    %v887 = vpop.f32.mrf.mxu0
    %v888 = vadd.f32 %v599, %v887
    %889 = vmatprep.mubr.bf16.mxu0 0
    %890 = vmatmul.mubr.bf16.gmra.mxu0 %v726
    %v891 = vpop.f32.mrf.mxu0
    %v892 = vadd.f32 %v604, %v891
    %v893 = vpop.f32.mrf.mxu0
    %v894 = vadd.f32 %v604, %v893
    %v895 = vpop.f32.mrf.mxu0
    %v896 = vadd.f32 %v609, %v895
    %v897 = vpop.f32.mrf.mxu0
    %v898 = vadd.f32 %v609, %v897
    %899 = vmatprep.mubr.bf16.mxu0 0
    %900 = vmatmul.mubr.bf16.gmra.mxu0 %v727
    %v901 = vpop.f32.mrf.mxu0
    %v902 = vadd.f32 %v614, %v901
    %v903 = vpop.f32.mrf.mxu0
    %v904 = vadd.f32 %v614, %v903
    %v905 = vpop.f32.mrf.mxu0
    %v906 = vadd.f32 %v619, %v905
    %v907 = vpop.f32.mrf.mxu0
    %v908 = vadd.f32 %v619, %v907
    %909 = vmatprep.mubr.bf16.mxu0 0
    %910 = vmatmul.mubr.bf16.gmra.mxu0 %v728
    %v911 = vpop.f32.mrf.mxu0
    %v912 = vadd.f32 %v624, %v911
    %v913 = vpop.f32.mrf.mxu0
    %v914 = vadd.f32 %v624, %v913
    %v915 = vpop.f32.mrf.mxu0
    %v916 = vadd.f32 %v629, %v915
    %v917 = vpop.f32.mrf.mxu0
    %v918 = vadd.f32 %v629, %v917
    %919 = vmatprep.mubr.bf16.mxu0 0
    %920 = vmatmul.mubr.bf16.gmra.mxu0 %v729
    %v921 = vpop.f32.mrf.mxu0
    %v922 = vadd.f32 %v634, %v921
    %v923 = vpop.f32.mrf.mxu0
    %v924 = vadd.f32 %v634, %v923
    %v925 = vpop.f32.mrf.mxu0
    %v926 = vadd.f32 %v639, %v925
    %v927 = vpop.f32.mrf.mxu0
    %v928 = vadd.f32 %v639, %v927
    %929 = vmatprep.mubr.bf16.mxu0 0
    %930 = vmatmul.mubr.bf16.gmra.mxu0 %v730
    %v931 = vpop.f32.mrf.mxu0
    %v932 = vadd.f32 %v644, %v931
    %v933 = vpop.f32.mrf.mxu0
    %v934 = vadd.f32 %v644, %v933
    %v935 = vpop.f32.mrf.mxu0
    %v936 = vadd.f32 %v649, %v935
    %v937 = vpop.f32.mrf.mxu0
    %v938 = vadd.f32 %v649, %v937
    %939 = vdwg.mxu0
    %v940 = vmax.f32 %v782, 0.0
    %v941 = vmax.f32 %v784, 0.0
    %v942 = vmax.f32 %v786, 0.0
    %v943 = vmax.f32 %v788, 0.0
    %v944 = vmax.f32 %v792, 0.0
    %v945 = vmax.f32 %v794, 0.0
    %v946 = vmax.f32 %v796, 0.0
    %v947 = vmax.f32 %v798, 0.0
    %v948 = vmax.f32 %v802, 0.0
    %v949 = vmax.f32 %v804, 0.0
    %v950 = vmax.f32 %v806, 0.0
    %v951 = vmax.f32 %v808, 0.0
    %v952 = vmax.f32 %v812, 0.0
    %v953 = vmax.f32 %v814, 0.0
    %v954 = vmax.f32 %v816, 0.0
    %v955 = vmax.f32 %v818, 0.0
    %v956 = vmax.f32 %v822, 0.0
    %v957 = vmax.f32 %v824, 0.0
    %v958 = vmax.f32 %v826, 0.0
    %v959 = vmax.f32 %v828, 0.0
    %v960 = vmax.f32 %v832, 0.0
    %v961 = vmax.f32 %v834, 0.0
    %v962 = vmax.f32 %v836, 0.0
    %v963 = vmax.f32 %v838, 0.0
    %v964 = vmax.f32 %v842, 0.0
    %v965 = vmax.f32 %v844, 0.0
    %v966 = vmax.f32 %v846, 0.0
    %v967 = vmax.f32 %v848, 0.0
    %v968 = vmax.f32 %v852, 0.0
    %v969 = vmax.f32 %v854, 0.0
    %v970 = vmax.f32 %v856, 0.0
    %v971 = vmax.f32 %v858, 0.0
    %v972 = vmax.f32 %v862, 0.0
    %v973 = vmax.f32 %v864, 0.0
    %v974 = vmax.f32 %v866, 0.0
    %v975 = vmax.f32 %v868, 0.0
    %v976 = vmax.f32 %v872, 0.0
    %v977 = vmax.f32 %v874, 0.0
    %v978 = vmax.f32 %v876, 0.0
    %v979 = vmax.f32 %v878, 0.0
    %v980 = vmax.f32 %v882, 0.0
    %v981 = vmax.f32 %v884, 0.0
    %v982 = vmax.f32 %v886, 0.0
    %v983 = vmax.f32 %v888, 0.0
    %v984 = vmax.f32 %v892, 0.0
    %v985 = vmax.f32 %v894, 0.0
    %v986 = vmax.f32 %v896, 0.0
    %v987 = vmax.f32 %v898, 0.0
    %v988 = vmax.f32 %v902, 0.0
    %v989 = vmax.f32 %v904, 0.0
    %v990 = vmax.f32 %v906, 0.0
    %v991 = vmax.f32 %v908, 0.0
    %v992 = vmax.f32 %v912, 0.0
    %v993 = vmax.f32 %v914, 0.0
    %v994 = vmax.f32 %v916, 0.0
    %v995 = vmax.f32 %v918, 0.0
    %v996 = vmax.f32 %v922, 0.0
    %v997 = vmax.f32 %v924, 0.0
    %v998 = vmax.f32 %v926, 0.0
    %v999 = vmax.f32 %v928, 0.0
    %v1000 = vmax.f32 %v932, 0.0
    %v1001 = vmax.f32 %v934, 0.0
    %v1002 = vmax.f32 %v936, 0.0
    %v1003 = vmax.f32 %v938, 0.0
    %v1004 = vld [vmem:[%s5] sm:$0xf]
    %v1005 = vpack.c.bf16 %v942, %v940
    %v1006 = vpack.c.bf16 %v943, %v941
    %v1007 = vpack.c.bf16 %v946, %v944
    %v1008 = vpack.c.bf16 %v947, %v945
    %v1009 = vpack.c.bf16 %v950, %v948
    %v1010 = vpack.c.bf16 %v951, %v949
    %v1011 = vpack.c.bf16 %v954, %v952
    %v1012 = vpack.c.bf16 %v955, %v953
    %v1013 = vpack.c.bf16 %v958, %v956
    %v1014 = vpack.c.bf16 %v959, %v957
    %v1015 = vpack.c.bf16 %v962, %v960
    %v1016 = vpack.c.bf16 %v963, %v961
    %v1017 = vpack.c.bf16 %v966, %v964
    %v1018 = vpack.c.bf16 %v967, %v965
    %v1019 = vpack.c.bf16 %v970, %v968
    %v1020 = vpack.c.bf16 %v971, %v969
    %v1021 = vpack.c.bf16 %v974, %v972
    %v1022 = vpack.c.bf16 %v975, %v973
    %v1023 = vpack.c.bf16 %v978, %v976
    %v1024 = vpack.c.bf16 %v979, %v977
    %v1025 = vpack.c.bf16 %v982, %v980
    %v1026 = vpack.c.bf16 %v983, %v981
    %v1027 = vpack.c.bf16 %v986, %v984
    %v1028 = vpack.c.bf16 %v987, %v985
    %v1029 = vpack.c.bf16 %v990, %v988
    %v1030 = vpack.c.bf16 %v991, %v989
    %v1031 = vpack.c.bf16 %v994, %v992
    %v1032 = vpack.c.bf16 %v995, %v993
    %v1033 = vpack.c.bf16 %v998, %v996
    %v1034 = vpack.c.bf16 %v999, %v997
    %v1035 = vpack.c.bf16 %v1002, %v1000
    %v1036 = vpack.c.bf16 %v1003, %v1001
    %v1037 = vld [vmem:[%s6] sm:$0xf]
    %1039 = vset.pattern.permute.xlu0 0
    %1040 = vperm.xlu0 %1039, %v1037
    %v1041 = vpop.permute.xlu0 %1040
    %v1045 = vunpack.c.l.s4 1983009808
    %v1046 = vunpack.c.0.s8 %v1045
    %v1047 = vlaneseq
    %v1048 = vshrl.u32 %v1047, 7
    %v1049 = vsub.s32 %v1046, %v1048
    %v1050 = vrot.slane %v1004, %v1049
    %v1051 = vcombine.high %v1050, %v1050
    %1054 = vmatprep.subr.bf16.mxu0 %v1020
    %1055 = vmatpush1.bf16.msra.mxu0 %v1019
    %1056 = vmatprep.subr.bf16.mxu0 %v1018
    %1057 = vmatpush1.bf16.msra.mxu0 %v1017
    %1058 = vmatprep.subr.bf16.mxu0 %v1016
    %1059 = vmatpush1.bf16.msra.mxu0 %v1015
    %1060 = vmatprep.subr.bf16.mxu0 %v1014
    %1061 = vmatpush1.bf16.msra.mxu0 %v1013
    %1062 = vmatprep.subr.bf16.mxu0 %v1012
    %1063 = vmatpush1.bf16.msra.mxu0 %v1011
    %1064 = vmatprep.subr.bf16.mxu0 %v1010
    %1065 = vmatpush1.bf16.msra.mxu0 %v1009
    %1066 = vmatprep.subr.bf16.mxu0 %v1008
    %1067 = vmatpush1.bf16.msra.mxu0 %v1007
    %1068 = vmatprep.subr.bf16.mxu0 %v1006
    %1069 = vmatpush1.bf16.msra.mxu0 %v1005
    %1070 = vmatprep.subr.bf16.mxu0 %v1036
    %1071 = vmatpush2.bf16.msra.mxu0 %v1035
    %1072 = vmatprep.subr.bf16.mxu0 %v1034
    %1073 = vmatpush2.bf16.msra.mxu0 %v1033
    %1074 = vmatprep.subr.bf16.mxu0 %v1032
    %1075 = vmatpush2.bf16.msra.mxu0 %v1031
    %1076 = vmatprep.subr.bf16.mxu0 %v1030
    %1077 = vmatpush2.bf16.msra.mxu0 %v1029
    %1078 = vmatprep.subr.bf16.mxu0 %v1028
    %1079 = vmatpush2.bf16.msra.mxu0 %v1027
    %1080 = vmatprep.subr.bf16.mxu0 %v1026
    %1081 = vmatpush2.bf16.msra.mxu0 %v1025
    %1082 = vmatprep.subr.bf16.mxu0 %v1024
    %1083 = vmatpush2.bf16.msra.mxu0 %v1023
    %1084 = vmatprep.subr.bf16.mxu0 %v1022
    %1085 = vmatpush2.bf16.msra.mxu0 %v1021
    %1086 = vmatprep.mubr.bf16.mxu0 %v1051
    %1087 = vmatmul.mubr.bf16.gmra.mxu0 %v1050
    %v1088 = vpop.f32.mrf.mxu0
    %v1089 = vadd.f32 %v1041, %v1088
    %v1090 = vpop.f32.mrf.mxu0
    %v1091 = vadd.f32 %v1041, %v1090
    %v1092 = vpop.f32.mrf.mxu0
    %v1093 = vpop.f32.mrf.mxu0
    %1094 = vdwg.mxu0
    %vm1095 = vcmask 1043456
    %v1096 = vsel %vm1095, %v1089, -inf
    %v1097 = vrot.slane %v1096, 4
    %v1098 = vmax.f32 %v1096, %v1097
    %v1099 = vrot.slane %v1098, 2
    %v1100 = vmax.f32 %v1098, %v1099
    %v1101 = vrot.slane %v1100, 1
    %v1102 = vmax.f32 %v1100, %v1101
    %v1103 = vsel %vm1095, %v1091, -inf
    %v1104 = vrot.slane %v1103, 4
    %v1105 = vmax.f32 %v1103, %v1104
    %v1106 = vrot.slane %v1105, 2
    %v1107 = vmax.f32 %v1105, %v1106
    %v1108 = vrot.slane %v1107, 1
    %v1109 = vmax.f32 %v1107, %v1108
    %v1110 = vsub.f32 %v1089, %v1102
    %v1111 = vsub.f32 %v1091, %v1109
    %v1112 = vmul.f32 %v1110, 1.442695
    %v1113 = vpow.pop %v1112
    %v1114 = vmul.f32 %v1111, 1.442695
    %v1115 = vpow.pop %v1114
    %v1116 = vsel %vm1095, %v1113, 0.0
    %v1117 = vrot.slane %v1116, 4
    %v1118 = vadd.f32 %v1116, %v1117
    %v1119 = vrot.slane %v1118, 2
    %v1120 = vadd.f32 %v1118, %v1119
    %v1121 = vrot.slane %v1120, 1
    %v1122 = vadd.f32 %v1120, %v1121
    %v1123 = vsel %vm1095, %v1115, 0.0
    %v1124 = vrot.slane %v1123, 4
    %v1125 = vadd.f32 %v1123, %v1124
    %v1126 = vrot.slane %v1125, 2
    %v1127 = vadd.f32 %v1125, %v1126
    %v1128 = vrot.slane %v1127, 1
    %v1129 = vadd.f32 %v1127, %v1128
    %v1130 = vlog2.pop %v1122
    %v1131 = vmul.f32 %v1130, 0.6931472
    %v1132 = vlog2.pop %v1129
    %v1133 = vmul.f32 %v1132, 0.6931472
    %v1134 = vsub.f32 %v1110, %v1131
    %v1135 = vsub.f32 %v1111, %v1133
    %v1136 = vmul.f32 %v1134, 1.442695
    %v1137 = vpow.pop %v1136
    %v1138 = vmul.f32 %v1135, 1.442695
    %v1139 = vpow.pop %v1138
    %v1142 = vrot.slane %v1137, 4
    %v1143 = vrot.slane %v1139, 4
    %v1146 = vsel %vm1095, %v1134, %v1142
    %v1147 = vsel %vm1095, %v1135, %v1143
    %1148 = vst [vmem:[#allocation2] sm:$0xff] %v1146
    %1149 = vst [vmem:[#allocation2 + $0x8] sm:$0xff] %v1147
    // Predicated region
    $region30: #{tpu_custom_call.1} parent=1 // pred_check
      _
    $region31: #{tpu_custom_call.1} parent=1 // pred_check_branch
      %1151 = sbr.rel (0) target = $region33
    $region32: #{tpu_custom_call.1} parent=1 // pred_region
      %s1153 = ssub.s32 256, 256
      %1154 = vsyncadd [#allocation3], %s1153
      %s1156 = sshll.u32 [#allocation2], 4
      %s1157 = int_to_ptr.vmem [resolvable:$true] %s1156
      %1159 = dma.vmem_to_hbm [thread:$0]  %s1157, 256, %s7, [#allocation3]
    $region33: #{tpu_custom_call.1} parent=1 // pred_fallthru
      _
    // Predicated region
    $region34: #{tpu_custom_call.1} parent=1 // pred_check
      _
    $region35: #{tpu_custom_call.1} parent=1 // pred_check_branch
      %1161 = sbr.rel (0) target = $region37
    $region36: #{tpu_custom_call.1} parent=1 // pred_region
      %1162 = dma.done [#allocation3], 256
    $region37: #{tpu_custom_call.1} parent=1 // pred_fallthru
      _
    %1163 = vsyncpa [#allocation3], 1

</llo_original>
